<compile_context>
chip_gen: v7x
topology: tpu7x:2x2x1
jax: 0.10.0
libtpu: 0.0.40
codegen_flags: <defaults>
</compile_context>

<pallas_src>
import functools

import jax
import jax.numpy as jnp
from jax import lax
from jax.experimental import pallas as pl
from jax.experimental.pallas import tpu as pltpu


def _round_up(x, m):
    return (x + m - 1) // m * m


# ---------------------------------------------------------------------------
# Kernel 1: fused QKV projection (computed once, not per query tile).
# ---------------------------------------------------------------------------
def _qkv_proj_kernel(x_ref, w_ref, q_ref, k_ref, v_ref, *, d_pad, scale):
    x = x_ref[...]
    w = w_ref[...]  # (3*d_pad, d_pad), PyTorch (out, in) layout
    # y = x @ W.T without materializing a transpose: contract in_features dims.
    qkv = lax.dot_general(
        x, w, dimension_numbers=(((1,), (1,)), ((), ())),
        preferred_element_type=jnp.float32)               # (TQ, 3*d_pad) f32
    # Fold the 1/sqrt(d_model) softmax scale into q (O(S*D), not O(S^2)).
    q_ref[...] = (qkv[:, :d_pad] * scale).astype(q_ref.dtype)
    k_ref[...] = qkv[:, d_pad:2 * d_pad].astype(k_ref.dtype)
    v_ref[...] = qkv[:, 2 * d_pad:3 * d_pad].astype(v_ref.dtype)


# ---------------------------------------------------------------------------
# Kernel 2: flash-style attention over (query tiles, key tiles).
# ---------------------------------------------------------------------------
def _attention_kernel(q_ref, k_ref, v_ref, o_ref, m_sc, l_sc, acc_sc, *,
                      seq_len, tk, need_mask):
    kv = pl.program_id(1)

    @pl.when(kv == 0)
    def _():
        m_sc[...] = jnp.full_like(m_sc, -jnp.inf)
        l_sc[...] = jnp.zeros_like(l_sc)
        acc_sc[...] = jnp.zeros_like(acc_sc)

    q = q_ref[...]
    k = k_ref[...]
    # scores = q @ k.T via dot_general contracting the feature dim (no copy).
    s = lax.dot_general(
        q, k, dimension_numbers=(((1,), (1,)), ((), ())),
        preferred_element_type=jnp.float32)               # (TQ, TK) f32

    if need_mask:  # mask zero-padded key rows (static trace-time decision)
        key_idx = kv * tk + lax.broadcasted_iota(jnp.int32, s.shape, 1)
        s = jnp.where(key_idx < seq_len, s, -1e30)

    m_prev = m_sc[...]
    m_new = jnp.maximum(m_prev, jnp.max(s, axis=1, keepdims=True))
    alpha = jnp.exp(m_prev - m_new)
    p = jnp.exp(s - m_new)
    l_sc[...] = alpha * l_sc[...] + jnp.sum(p, axis=1, keepdims=True)
    acc_sc[...] = alpha * acc_sc[...] + jnp.dot(
        p.astype(v_ref.dtype), v_ref[...], preferred_element_type=jnp.float32)
    m_sc[...] = m_new

    @pl.when(kv == pl.num_programs(1) - 1)
    def _():
        inv_l = pl.reciprocal(l_sc[...], approx=True)     # EUP vrcp, own slot
        o_ref[...] = (acc_sc[...] * inv_l).astype(o_ref.dtype)


def self_attention(token_encoding, w_q, w_k, w_v):
    seq_len, d_model = token_encoding.shape
    dtype = token_encoding.dtype

    # Lane-dense padding: feature dim to a multiple of 128, seq to tile grain.
    d_pad = _round_up(d_model, 128)
    tq = min(128, _round_up(seq_len, 8))
    tk = tq
    s_pad = _round_up(seq_len, tq)

    x = jnp.zeros((s_pad, d_pad), dtype).at[:seq_len, :d_model].set(token_encoding)
    w_qkv = jnp.zeros((3 * d_pad, d_pad), dtype)
    w_qkv = w_qkv.at[0 * d_pad:0 * d_pad + d_model, :d_model].set(w_q.astype(dtype))
    w_qkv = w_qkv.at[1 * d_pad:1 * d_pad + d_model, :d_model].set(w_k.astype(dtype))
    w_qkv = w_qkv.at[2 * d_pad:2 * d_pad + d_model, :d_model].set(w_v.astype(dtype))

    scale = 1.0 / float(d_model) ** 0.5   # k.size(1) == d_model in the module

    num_q_tiles = s_pad // tq
    num_k_tiles = s_pad // tk

    # ---- pass 1: fused QKV projection ------------------------------------
    q, k, v = pl.pallas_call(
        functools.partial(_qkv_proj_kernel, d_pad=d_pad, scale=scale),
        out_shape=(
            jax.ShapeDtypeStruct((s_pad, d_pad), dtype),
            jax.ShapeDtypeStruct((s_pad, d_pad), dtype),
            jax.ShapeDtypeStruct((s_pad, d_pad), dtype),
        ),
        grid_spec=pltpu.PrefetchScalarGridSpec(
            num_scalar_prefetch=0,
            grid=(num_q_tiles,),
            in_specs=[
                pl.BlockSpec((tq, d_pad), lambda i: (i, 0)),
                pl.BlockSpec((3 * d_pad, d_pad), lambda i: (0, 0)),
            ],
            out_specs=[
                pl.BlockSpec((tq, d_pad), lambda i: (i, 0)),
                pl.BlockSpec((tq, d_pad), lambda i: (i, 0)),
                pl.BlockSpec((tq, d_pad), lambda i: (i, 0)),
            ],
        ),
        compiler_params=pltpu.CompilerParams(
            dimension_semantics=("parallel",)),
    )(x, w_qkv)

    # ---- pass 2: flash attention ------------------------------------------
    out_pad = pl.pallas_call(
        functools.partial(_attention_kernel, seq_len=seq_len, tk=tk,
                          need_mask=(s_pad != seq_len)),
        out_shape=jax.ShapeDtypeStruct((s_pad, d_pad), dtype),
        grid_spec=pltpu.PrefetchScalarGridSpec(
            num_scalar_prefetch=0,
            grid=(num_q_tiles, num_k_tiles),
            in_specs=[
                pl.BlockSpec((tq, d_pad), lambda qi, ki: (qi, 0)),
                pl.BlockSpec((tk, d_pad), lambda qi, ki: (ki, 0)),
                pl.BlockSpec((tk, d_pad), lambda qi, ki: (ki, 0)),
            ],
            out_specs=pl.BlockSpec((tq, d_pad), lambda qi, ki: (qi, 0)),
            scratch_shapes=[
                pltpu.VMEM((tq, 1), jnp.float32),      # running max m_i
                pltpu.VMEM((tq, 1), jnp.float32),      # running denom l_i
                pltpu.VMEM((tq, d_pad), jnp.float32),  # output accumulator
            ],
        ),
        compiler_params=pltpu.CompilerParams(
            dimension_semantics=("parallel", "arbitrary")),
    )(q, k, v)

    return out_pad[:seq_len, :d_model]


def _reference(token_encoding, w_q, w_k, w_v):
    q = token_encoding @ w_q.T
    k = token_encoding @ w_k.T
    v = token_encoding @ w_v.T
    sims = q @ k.T
    scaled = sims / jnp.sqrt(jnp.asarray(k.shape[1], jnp.float32))
    p = jax.nn.softmax(scaled, axis=1)
    return p @ v


if __name__ == "__main__":
    seq_len, d_model = 8, 32
    key = jax.random.PRNGKey(0)
    kx, kq, kk, kv = jax.random.split(key, 4)

    # Deterministic synthetic parameters (PyTorch Linear weight shape: (out, in)).
    x = jax.random.normal(kx, (seq_len, d_model), dtype=jnp.float32)
    w_q = jax.random.normal(kq, (d_model, d_model), dtype=jnp.float32) * (d_model ** -0.5)
    w_k = jax.random.normal(kk, (d_model, d_model), dtype=jnp.float32) * (d_model ** -0.5)
    w_v = jax.random.normal(kv, (d_model, d_model), dtype=jnp.float32) * (d_model ** -0.5)

    out = self_attention(x, w_q, w_k, w_v)
    out = jax.block_until_ready(out)

    ref = _reference(x, w_q, w_k, w_v)
    # approx=True reciprocal (EUP vrcp) introduces a tiny (~1e-4) relative delta.
    assert jnp.allclose(out, ref, atol=5e-3, rtol=5e-3), "mismatch vs reference"

    print("KERNEL_OK")
</pallas_src>

<mosaic_0001>
module attributes {stable_mosaic.version = 11 : i64} {
  func.func @_qkv_proj_kernel(%arg0: i32, %arg1: memref<8x128xf32, #tpu.memory_space<vmem>>, %arg2: memref<384x128xf32, #tpu.memory_space<vmem>>, %arg3: memref<8x128xf32, #tpu.memory_space<vmem>>, %arg4: memref<8x128xf32, #tpu.memory_space<vmem>>, %arg5: memref<8x128xf32, #tpu.memory_space<vmem>>) attributes {dimension_semantics = [#tpu.dimension_semantics<parallel>], iteration_bounds = array<i64: 1>, scalar_prefetch = 0 : i64, scratch_operands = 0 : i64, tpu.core_type = #tpu.core_type<tc>, window_params = [{transform_indices = @transform_0, window_bounds = array<i64: 8, 128>}, {pipeline_mode = #tpu.pipeline_mode<synchronous>, transform_indices = @transform_1, window_bounds = array<i64: 384, 128>}, {transform_indices = @transform_2, window_bounds = array<i64: 8, 128>}, {transform_indices = @transform_3, window_bounds = array<i64: 8, 128>}, {transform_indices = @transform_4, window_bounds = array<i64: 8, 128>}]} {
    %c0 = arith.constant 0 : index
    %c0_0 = arith.constant 0 : index
    %0 = vector.load %arg1[%c0, %c0_0] : memref<8x128xf32, #tpu.memory_space<vmem>>, vector<8x128xf32>
    %c0_1 = arith.constant 0 : index
    %c0_2 = arith.constant 0 : index
    %1 = vector.load %arg2[%c0_1, %c0_2] : memref<384x128xf32, #tpu.memory_space<vmem>>, vector<384x128xf32>
    %cst = arith.constant dense<0.000000e+00> : vector<8x384xf32>
    %2 = tpu.matmul %0, %1, %cst {dimension_numbers = #tpu.dot_dimension_numbers<[1], [1], [0], [0], [0, 0, 1, 0], [], []>} : vector<8x128xf32>, vector<384x128xf32>, vector<8x384xf32> -> vector<8x384xf32>
    %3 = vector.extract_strided_slice %2 {offsets = [0, 0], sizes = [8, 128], strides = [1, 1]} : vector<8x384xf32> to vector<8x128xf32>
    %cst_3 = arith.constant 0.176776692 : f32
    %4 = vector.broadcast %cst_3 : f32 to vector<8x128xf32>
    %5 = arith.mulf %3, %4 : vector<8x128xf32>
    %c0_4 = arith.constant 0 : index
    %c0_5 = arith.constant 0 : index
    %6 = vector.load %arg3[%c0_4, %c0_5] : memref<8x128xf32, #tpu.memory_space<vmem>>, vector<8x128xf32>
    tpu.vector_store %arg3[%c0_4, %c0_5], %5 {strides = array<i32>} : memref<8x128xf32, #tpu.memory_space<vmem>>, vector<8x128xf32>,
    %7 = vector.extract_strided_slice %2 {offsets = [0, 128], sizes = [8, 128], strides = [1, 1]} : vector<8x384xf32> to vector<8x128xf32>
    %c0_6 = arith.constant 0 : index
    %c0_7 = arith.constant 0 : index
    %8 = vector.load %arg4[%c0_6, %c0_7] : memref<8x128xf32, #tpu.memory_space<vmem>>, vector<8x128xf32>
    tpu.vector_store %arg4[%c0_6, %c0_7], %7 {strides = array<i32>} : memref<8x128xf32, #tpu.memory_space<vmem>>, vector<8x128xf32>,
    %9 = vector.extract_strided_slice %2 {offsets = [0, 256], sizes = [8, 128], strides = [1, 1]} : vector<8x384xf32> to vector<8x128xf32>
    %c0_8 = arith.constant 0 : index
    %c0_9 = arith.constant 0 : index
    %10 = vector.load %arg5[%c0_8, %c0_9] : memref<8x128xf32, #tpu.memory_space<vmem>>, vector<8x128xf32>
    tpu.vector_store %arg5[%c0_8, %c0_9], %9 {strides = array<i32>} : memref<8x128xf32, #tpu.memory_space<vmem>>, vector<8x128xf32>,
    return
  }
  func.func @transform_0(%arg0: i32) -> (i32, i32) {
    %c0_i32 = arith.constant 0 : i32
    %c0_i32_0 = arith.constant 0 : i32
    return %arg0, %c0_i32 : i32, i32
  }
  func.func @transform_1(%arg0: i32) -> (i32, i32) {
    %c0_i32 = arith.constant 0 : i32
    %c0_i32_0 = arith.constant 0 : i32
    %c0_i32_1 = arith.constant 0 : i32
    return %c0_i32, %c0_i32_0 : i32, i32
  }
  func.func @transform_2(%arg0: i32) -> (i32, i32) {
    %c0_i32 = arith.constant 0 : i32
    %c0_i32_0 = arith.constant 0 : i32
    return %arg0, %c0_i32 : i32, i32
  }
  func.func @transform_3(%arg0: i32) -> (i32, i32) {
    %c0_i32 = arith.constant 0 : i32
    %c0_i32_0 = arith.constant 0 : i32
    return %arg0, %c0_i32 : i32, i32
  }
  func.func @transform_4(%arg0: i32) -> (i32, i32) {
    %c0_i32 = arith.constant 0 : i32
    %c0_i32_0 = arith.constant 0 : i32
    return %arg0, %c0_i32 : i32, i32
  }
}

</mosaic_0001>

<llo_original>
// kernel: tpu_custom_call.1
$region0: #{tpu_custom_call.1}
  #allocation0 [shape = 'u32[]', space=smem, size = 0x4, offset = 0x4, fixed_abs, tag = 'smem constant byte address 0x4 - core index']
  #allocation1 [shape = 'u32[144,128]{1,0:T(1,128)}', space=vmem, size = 0x12000, scoped, tag = 'internal scratch']
  %s0 = inlined_call_operand.hbm [shape: f32[8,128], index: 0, kind: input, shape index: {}]
  %s1 = inlined_call_operand.hbm [shape: f32[384,128], index: 1, kind: input, shape index: {}]
  %s2 = inlined_call_operand.hbm [shape: f32[8,128], index: 2, kind: output, shape index: {0}]
  %s3 = inlined_call_operand.hbm [shape: f32[8,128], index: 3, kind: output, shape index: {1}]
  %s4 = inlined_call_operand.hbm [shape: f32[8,128], index: 4, kind: output, shape index: {2}]
  %5 = xla_tuple %s2, %s3, %s4
  %s6 = sld [smem:[#allocation0]]
  $region42: #{tpu_custom_call.1} parent=0
    _
  %s8 = ssub.s32 1, %s6
  %s9 = scalar_select 0, %s8, %s6
  $region1: #{tpu_custom_call.1} parent=0
    #allocation2 [shape = 'u8[4096]{0}', space=vmem, size = 0x1000, scoped, tag = 'input window, operand 0, single buffered']
    #allocation3 [shape = 's32[1]{0}', space=sflag, size = 0x4, scoped, tag = 'scoped memory for tpu_custom_call.1']
    #allocation4 [shape = 's32[1]{0}', space=sflag, size = 0x4, scoped, tag = 'scoped memory for tpu_custom_call.1']
    #allocation5 [shape = 'u8[196608]{0}', space=vmem, size = 0x30000, scoped, tag = 'input window, operand 1, single buffered']
    #allocation6 [shape = 's32[1]{0}', space=sflag, size = 0x4, scoped, tag = 'scoped memory for tpu_custom_call.1']
    #allocation7 [shape = 'u8[4096]{0}', space=vmem, size = 0x1000, scoped, tag = 'output window, operand 0, single buffered']
    #allocation8 [shape = 'u8[4096]{0}', space=vmem, size = 0x1000, scoped, tag = 'output window, operand 1, single buffered']
    #allocation9 [shape = 's32[1]{0}', space=sflag, size = 0x4, scoped, tag = 'scoped memory for tpu_custom_call.1']
    #allocation10 [shape = 'u8[4096]{0}', space=vmem, size = 0x1000, scoped, tag = 'output window, operand 2, single buffered']
    %10 = vsyncpa [#allocation3], 0
    %11 = vsyncpa [#allocation6], 0
    %12 = vsyncpa [#allocation4], 0
    %13 = vsyncpa [#allocation9], 0
    // Predicated region
    $region2: #{tpu_custom_call.1} parent=1 // pred_check
      _
    $region3: #{tpu_custom_call.1} parent=1 // pred_check_branch
      %15 = sbr.rel (0) target = $region5
    $region4: #{tpu_custom_call.1} parent=1 // pred_region
      %s17 = ssub.s32 128, 128
      %18 = vsyncadd [#allocation3], %s17
      %s20 = sshll.u32 [#allocation2], 4
      %s21 = int_to_ptr.vmem [resolvable:$true] %s20
      %23 = dma.hbm_to_vmem [thread:$0]  %s0, 128, %s21, [#allocation3]
    $region5: #{tpu_custom_call.1} parent=1 // pred_fallthru
      _
    // Predicated region
    $region6: #{tpu_custom_call.1} parent=1 // pred_check
      _
    $region7: #{tpu_custom_call.1} parent=1 // pred_check_branch
      %25 = sbr.rel (0) target = $region9
    $region8: #{tpu_custom_call.1} parent=1 // pred_region
      %s27 = ssub.s32 6144, 6144
      %28 = vsyncadd [#allocation6], %s27
      %s29 = sshll.u32 [#allocation5], 4
      %s30 = int_to_ptr.vmem [resolvable:$true] %s29
      %35 = dma.hbm_to_vmem [thread:$0]  %s1, 6144, %s30, [#allocation6], 128, 128, 8
    $region9: #{tpu_custom_call.1} parent=1 // pred_fallthru
      _
    // Predicated region
    $region10: #{tpu_custom_call.1} parent=1 // pred_check
      _
    $region11: #{tpu_custom_call.1} parent=1 // pred_check_branch
      %37 = sbr.rel (0) target = $region13
    $region12: #{tpu_custom_call.1} parent=1 // pred_region
      %38 = dma.done [#allocation3], 128
    $region13: #{tpu_custom_call.1} parent=1 // pred_fallthru
      _
    // Predicated region
    $region14: #{tpu_custom_call.1} parent=1 // pred_check
      _
    $region15: #{tpu_custom_call.1} parent=1 // pred_check_branch
      %40 = sbr.rel (0) target = $region17
    $region16: #{tpu_custom_call.1} parent=1 // pred_region
      %41 = dma.done [#allocation6], 6144
    $region17: #{tpu_custom_call.1} parent=1 // pred_fallthru
      _
    %v42 = vld [vmem:[#allocation2] sm:$0xff]
    %v43 = vld [vmem:[#allocation5] sm:$0xff]
    %v44 = vld [vmem:[#allocation5 + $0x8] sm:$0xff]
    %v45 = vld [vmem:[#allocation5 + $0x10] sm:$0xff]
    %v46 = vld [vmem:[#allocation5 + $0x18] sm:$0xff]
    %v47 = vld [vmem:[#allocation5 + $0x20] sm:$0xff]
    %v48 = vld [vmem:[#allocation5 + $0x28] sm:$0xff]
    %v49 = vld [vmem:[#allocation5 + $0x30] sm:$0xff]
    %v50 = vld [vmem:[#allocation5 + $0x38] sm:$0xff]
    %v51 = vld [vmem:[#allocation5 + $0x40] sm:$0xff]
    %v52 = vld [vmem:[#allocation5 + $0x48] sm:$0xff]
    %v53 = vld [vmem:[#allocation5 + $0x50] sm:$0xff]
    %v54 = vld [vmem:[#allocation5 + $0x58] sm:$0xff]
    %v55 = vld [vmem:[#allocation5 + $0x60] sm:$0xff]
    %v56 = vld [vmem:[#allocation5 + $0x68] sm:$0xff]
    %v57 = vld [vmem:[#allocation5 + $0x70] sm:$0xff]
    %v58 = vld [vmem:[#allocation5 + $0x78] sm:$0xff]
    %v59 = vld [vmem:[#allocation5 + $0x80] sm:$0xff]
    %v60 = vld [vmem:[#allocation5 + $0x88] sm:$0xff]
    %v61 = vld [vmem:[#allocation5 + $0x90] sm:$0xff]
    %v62 = vld [vmem:[#allocation5 + $0x98] sm:$0xff]
    %v63 = vld [vmem:[#allocation5 + $0xa0] sm:$0xff]
    %v64 = vld [vmem:[#allocation5 + $0xa8] sm:$0xff]
    %v65 = vld [vmem:[#allocation5 + $0xb0] sm:$0xff]
    %v66 = vld [vmem:[#allocation5 + $0xb8] sm:$0xff]
    %v67 = vld [vmem:[#allocation5 + $0xc0] sm:$0xff]
    %v68 = vld [vmem:[#allocation5 + $0xc8] sm:$0xff]
    %v69 = vld [vmem:[#allocation5 + $0xd0] sm:$0xff]
    %v70 = vld [vmem:[#allocation5 + $0xd8] sm:$0xff]
    %v71 = vld [vmem:[#allocation5 + $0xe0] sm:$0xff]
    %v72 = vld [vmem:[#allocation5 + $0xe8] sm:$0xff]
    %v73 = vld [vmem:[#allocation5 + $0xf0] sm:$0xff]
    %v74 = vld [vmem:[#allocation5 + $0xf8] sm:$0xff]
    %v75 = vld [vmem:[#allocation5 + $0x100] sm:$0xff]
    %v76 = vld [vmem:[#allocation5 + $0x108] sm:$0xff]
    %v77 = vld [vmem:[#allocation5 + $0x110] sm:$0xff]
    %v78 = vld [vmem:[#allocation5 + $0x118] sm:$0xff]
    %v79 = vld [vmem:[#allocation5 + $0x120] sm:$0xff]
    %v80 = vld [vmem:[#allocation5 + $0x128] sm:$0xff]
    %v81 = vld [vmem:[#allocation5 + $0x130] sm:$0xff]
    %v82 = vld [vmem:[#allocation5 + $0x138] sm:$0xff]
    %v83 = vld [vmem:[#allocation5 + $0x140] sm:$0xff]
    %v84 = vld [vmem:[#allocation5 + $0x148] sm:$0xff]
    %v85 = vld [vmem:[#allocation5 + $0x150] sm:$0xff]
    %v86 = vld [vmem:[#allocation5 + $0x158] sm:$0xff]
    %v87 = vld [vmem:[#allocation5 + $0x160] sm:$0xff]
    %v88 = vld [vmem:[#allocation5 + $0x168] sm:$0xff]
    %v89 = vld [vmem:[#allocation5 + $0x170] sm:$0xff]
    %v90 = vld [vmem:[#allocation5 + $0x178] sm:$0xff]
    %91 = vmatprep.subr.mxu0 0.0
    %92 = vmatpush1.xpose.msra.mxu0 %v43
    %93 = vmatprep.subr.mxu0 0.0
    %94 = vmatpush1.xpose.msra.mxu0 %v44
    %95 = vmatprep.subr.mxu0 0.0
    %96 = vmatpush1.xpose.msra.mxu0 %v45
    %97 = vmatprep.subr.mxu0 0.0
    %98 = vmatpush1.xpose.msra.mxu0 %v46
    %99 = vmatprep.subr.mxu0 0.0
    %100 = vmatpush1.xpose.msra.mxu0 %v47
    %101 = vmatprep.subr.mxu0 0.0
    %102 = vmatpush1.xpose.msra.mxu0 %v48
    %103 = vmatprep.subr.mxu0 0.0
    %104 = vmatpush1.xpose.msra.mxu0 %v49
    %105 = vmatprep.subr.mxu0 0.0
    %106 = vmatpush1.xpose.msra.mxu0 %v50
    %107 = vmatprep.subr.mxu0 0.0
    %108 = vmatpush1.xpose.msra.mxu0 %v51
    %109 = vmatprep.subr.mxu0 0.0
    %110 = vmatpush1.xpose.msra.mxu0 %v52
    %111 = vmatprep.subr.mxu0 0.0
    %112 = vmatpush1.xpose.msra.mxu0 %v53
    %113 = vmatprep.subr.mxu0 0.0
    %114 = vmatpush1.xpose.msra.mxu0 %v54
    %115 = vmatprep.subr.mxu0 0.0
    %116 = vmatpush1.xpose.msra.mxu0 %v55
    %117 = vmatprep.subr.mxu0 0.0
    %118 = vmatpush1.xpose.msra.mxu0 %v56
    %119 = vmatprep.subr.mxu0 0.0
    %120 = vmatpush1.xpose.msra.mxu0 %v57
    %121 = vmatprep.subr.mxu0 0.0
    %122 = vmatpush1.xpose.msra.mxu0 %v58
    %123 = vmatprep.subr.mxu0 0.0
    %124 = vmatpush1.xpose.msra.mxu0 %v59
    %125 = vmatprep.subr.mxu0 0.0
    %126 = vmatpush1.xpose.msra.mxu0 %v60
    %127 = vmatprep.subr.mxu0 0.0
    %128 = vmatpush1.xpose.msra.mxu0 %v61
    %129 = vmatprep.subr.mxu0 0.0
    %130 = vmatpush1.xpose.msra.mxu0 %v62
    %131 = vmatprep.subr.mxu0 0.0
    %132 = vmatpush1.xpose.msra.mxu0 %v63
    %133 = vmatprep.subr.mxu0 0.0
    %134 = vmatpush1.xpose.msra.mxu0 %v64
    %135 = vmatprep.subr.mxu0 0.0
    %136 = vmatpush1.xpose.msra.mxu0 %v65
    %137 = vmatprep.subr.mxu0 0.0
    %138 = vmatpush1.xpose.msra.mxu0 %v66
    %139 = vmatprep.subr.mxu0 0.0
    %140 = vmatpush1.xpose.msra.mxu0 %v67
    %141 = vmatprep.subr.mxu0 0.0
    %142 = vmatpush1.xpose.msra.mxu0 %v68
    %143 = vmatprep.subr.mxu0 0.0
    %144 = vmatpush1.xpose.msra.mxu0 %v69
    %145 = vmatprep.subr.mxu0 0.0
    %146 = vmatpush1.xpose.msra.mxu0 %v70
    %147 = vmatprep.subr.mxu0 0.0
    %148 = vmatpush1.xpose.msra.mxu0 %v71
    %149 = vmatprep.subr.mxu0 0.0
    %150 = vmatpush1.xpose.msra.mxu0 %v72
    %151 = vmatprep.subr.mxu0 0.0
    %152 = vmatpush1.xpose.msra.mxu0 %v73
    %153 = vmatprep.subr.mxu0 0.0
    %154 = vmatpush1.xpose.msra.mxu0 %v74
    %155 = vmatprep.mubr.f32.mxu0 0.0
    %156 = vmatmul.mubr.f32.gmra.mrb[0].mxu0 %v42
    %v157 = vpop.f32.mrb[0].mxu0
    %v158 = vadd.f32 0.0, %v157
    %v159 = vpop.f32.mrb[0].mxu0
    %v160 = vadd.f32 0.0, %v159
    %161 = vdwg.mxu0
    %162 = vmatprep.subr.mxu0 0.0
    %163 = vmatpush1.xpose.msra.mxu0 %v75
    %164 = vmatprep.subr.mxu0 0.0
    %165 = vmatpush1.xpose.msra.mxu0 %v76
    %166 = vmatprep.subr.mxu0 0.0
    %167 = vmatpush1.xpose.msra.mxu0 %v77
    %168 = vmatprep.subr.mxu0 0.0
    %169 = vmatpush1.xpose.msra.mxu0 %v78
    %170 = vmatprep.subr.mxu0 0.0
    %171 = vmatpush1.xpose.msra.mxu0 %v79
    %172 = vmatprep.subr.mxu0 0.0
    %173 = vmatpush1.xpose.msra.mxu0 %v80
    %174 = vmatprep.subr.mxu0 0.0
    %175 = vmatpush1.xpose.msra.mxu0 %v81
    %176 = vmatprep.subr.mxu0 0.0
    %177 = vmatpush1.xpose.msra.mxu0 %v82
    %178 = vmatprep.subr.mxu0 0.0
    %179 = vmatpush1.xpose.msra.mxu0 %v83
    %180 = vmatprep.subr.mxu0 0.0
    %181 = vmatpush1.xpose.msra.mxu0 %v84
    %182 = vmatprep.subr.mxu0 0.0
    %183 = vmatpush1.xpose.msra.mxu0 %v85
    %184 = vmatprep.subr.mxu0 0.0
    %185 = vmatpush1.xpose.msra.mxu0 %v86
    %186 = vmatprep.subr.mxu0 0.0
    %187 = vmatpush1.xpose.msra.mxu0 %v87
    %188 = vmatprep.subr.mxu0 0.0
    %189 = vmatpush1.xpose.msra.mxu0 %v88
    %190 = vmatprep.subr.mxu0 0.0
    %191 = vmatpush1.xpose.msra.mxu0 %v89
    %192 = vmatprep.subr.mxu0 0.0
    %193 = vmatpush1.xpose.msra.mxu0 %v90
    %194 = vmatprep.subr.mxu0 0.0
    %195 = vmatpush1.xpose.msra.mxu0 0.0
    %196 = vmatprep.subr.mxu0 0.0
    %197 = vmatpush1.xpose.msra.mxu0 0.0
    %198 = vmatprep.subr.mxu0 0.0
    %199 = vmatpush1.xpose.msra.mxu0 0.0
    %200 = vmatprep.subr.mxu0 0.0
    %201 = vmatpush1.xpose.msra.mxu0 0.0
    %202 = vmatprep.subr.mxu0 0.0
    %203 = vmatpush1.xpose.msra.mxu0 0.0
    %204 = vmatprep.subr.mxu0 0.0
    %205 = vmatpush1.xpose.msra.mxu0 0.0
    %206 = vmatprep.subr.mxu0 0.0
    %207 = vmatpush1.xpose.msra.mxu0 0.0
    %208 = vmatprep.subr.mxu0 0.0
    %209 = vmatpush1.xpose.msra.mxu0 0.0
    %210 = vmatprep.subr.mxu0 0.0
    %211 = vmatpush1.xpose.msra.mxu0 0.0
    %212 = vmatprep.subr.mxu0 0.0
    %213 = vmatpush1.xpose.msra.mxu0 0.0
    %214 = vmatprep.subr.mxu0 0.0
    %215 = vmatpush1.xpose.msra.mxu0 0.0
    %216 = vmatprep.subr.mxu0 0.0
    %217 = vmatpush1.xpose.msra.mxu0 0.0
    %218 = vmatprep.subr.mxu0 0.0
    %219 = vmatpush1.xpose.msra.mxu0 0.0
    %220 = vmatprep.subr.mxu0 0.0
    %221 = vmatpush1.xpose.msra.mxu0 0.0
    %222 = vmatprep.subr.mxu0 0.0
    %223 = vmatpush1.xpose.msra.mxu0 0.0
    %224 = vmatprep.subr.mxu0 0.0
    %225 = vmatpush1.xpose.msra.mxu0 0.0
    %226 = vmatprep.mubr.f32.mxu0 0.0
    %227 = vmatmul.mubr.f32.gmra.mrb[0].mxu0 %v42
    %v228 = vpop.f32.mrb[0].mxu0
    %v229 = vadd.f32 0.0, %v228
    %v230 = vpop.f32.mrb[0].mxu0
    %231 = vdwg.mxu0
    %v232 = vmul.f32 %v158, 0.17677669
    %233 = vst [vmem:[#allocation7] sm:$0xff] %v232
    %234 = vst [vmem:[#allocation8] sm:$0xff] %v160
    %235 = vst [vmem:[#allocation10] sm:$0xff] %v229
    // Predicated region
    $region18: #{tpu_custom_call.1} parent=1 // pred_check
      _
    $region19: #{tpu_custom_call.1} parent=1 // pred_check_branch
      %237 = sbr.rel (0) target = $region21
    $region20: #{tpu_custom_call.1} parent=1 // pred_region
      %s239 = ssub.s32 128, 128
      %240 = vsyncadd [#allocation4], %s239
      %s242 = sshll.u32 [#allocation7], 4
      %s243 = int_to_ptr.vmem [resolvable:$true] %s242
      %245 = dma.vmem_to_hbm [thread:$0]  %s243, 128, %s2, [#allocation4]
    $region21: #{tpu_custom_call.1} parent=1 // pred_fallthru
      _
    // Predicated region
    $region22: #{tpu_custom_call.1} parent=1 // pred_check
      _
    $region23: #{tpu_custom_call.1} parent=1 // pred_check_branch
      %247 = sbr.rel (0) target = $region25
    $region24: #{tpu_custom_call.1} parent=1 // pred_region
      %s249 = ssub.s32 128, 128
      %250 = vsyncadd [#allocation9], %s249
      %s252 = sshll.u32 [#allocation8], 4
      %s253 = int_to_ptr.vmem [resolvable:$true] %s252
      %255 = dma.vmem_to_hbm [thread:$0]  %s253, 128, %s3, [#allocation9]
    $region25: #{tpu_custom_call.1} parent=1 // pred_fallthru
      _
    // Predicated region
    $region26: #{tpu_custom_call.1} parent=1 // pred_check
      _
    $region27: #{tpu_custom_call.1} parent=1 // pred_check_branch
      %257 = sbr.rel (0) target = $region29
    $region28: #{tpu_custom_call.1} parent=1 // pred_region
      %s259 = ssub.s32 128, 128
      %260 = vsyncadd [#allocation9], %s259
      %s262 = sshll.u32 [#allocation10], 4
      %s263 = int_to_ptr.vmem [resolvable:$true] %s262
      %265 = dma.vmem_to_hbm [thread:$0]  %s263, 128, %s4, [#allocation9]
    $region29: #{tpu_custom_call.1} parent=1 // pred_fallthru
      _
    // Predicated region
    $region30: #{tpu_custom_call.1} parent=1 // pred_check
      _
    $region31: #{tpu_custom_call.1} parent=1 // pred_check_branch
      %267 = sbr.rel (0) target = $region33
    $region32: #{tpu_custom_call.1} parent=1 // pred_region
      %268 = dma.done [#allocation4], 128
    $region33: #{tpu_custom_call.1} parent=1 // pred_fallthru
      _
    // Predicated region
    $region34: #{tpu_custom_call.1} parent=1 // pred_check
      _
    $region35: #{tpu_custom_call.1} parent=1 // pred_check_branch
      %270 = sbr.rel (0) target = $region37
    $region36: #{tpu_custom_call.1} parent=1 // pred_region
      %271 = dma.done [#allocation9], 128
    $region37: #{tpu_custom_call.1} parent=1 // pred_fallthru
      _
    // Predicated region
    $region38: #{tpu_custom_call.1} parent=1 // pred_check
      _
    $region39: #{tpu_custom_call.1} parent=1 // pred_check_branch
      %273 = sbr.rel (0) target = $region41
    $region40: #{tpu_custom_call.1} parent=1 // pred_region
      %274 = dma.done [#allocation9], 128
    $region41: #{tpu_custom_call.1} parent=1 // pred_fallthru
      _
    %275 = vsyncpa [#allocation3], 1
    %276 = vsyncpa [#allocation6], 1
    %277 = vsyncpa [#allocation4], 1
    %278 = vsyncpa [#allocation9], 1

</llo_original>
